<compile_context>
chip_gen: v6e
topology: v6e:2x2x1
jax: 0.10.0
libtpu: 0.0.40
codegen_flags: <defaults>
</compile_context>

<pallas_src>
import math
import jax
import jax.numpy as jnp
from jax import lax
from jax.experimental import pallas as pl
from jax.experimental.pallas import tpu as pltpu


def attn_kernel(x1_ref, x2f_ref, wqt_ref, wkvt_ref, mask_ref, o_ref):
    """Single invocation handles the whole (tiny) problem.

    x1_ref  : (Lq, Dq)       bf16  shared query input
    x2f_ref : (B*Lk, Dk)     bf16  key/value input, batch flattened into sublanes
    wqt_ref : (Dq, HK)       bf16  Wq.T pre-scaled by 1/sqrt(Dq)
    wkvt_ref: (Dk, HK+HV)    bf16  [Wk.T | Wv.T] fused projection weight
    mask_ref: (Lq, B*Lk)     f32   additive attention mask, batch along lanes
    o_ref   : (B, Lq, HV)    f32   output
    """
    B, Lq, HV = o_ref.shape
    Lk = x2f_ref.shape[0] // B
    HK = wqt_ref.shape[1]
    f32, bf16 = jnp.float32, jnp.bfloat16

    # Batch-invariant Q projection (scale folded into Wq.T): one bf16 MXU matmul.
    q = jnp.dot(x1_ref[...], wqt_ref[...], preferred_element_type=f32)        # (Lq, HK)

    # Fused K|V projection for all batches: one 256-lane bf16 MXU matmul.
    kv = jnp.dot(x2f_ref[...], wkvt_ref[...], preferred_element_type=f32)     # (B*Lk, HK+HV)
    k = kv[:, :HK]                       # lane slice at the 128-lane vreg boundary: free
    v = kv[:, HK:]

    # Batched scores: one NT contraction (Lq,HK) x (B*Lk,HK)^T -> (Lq, B*Lk)
    # instead of B tiny matmuls (one k transpose total, on the otherwise-idle XLU).
    s = lax.dot_general(q.astype(bf16), k.astype(bf16),
                        (((1,), (1,)), ((), ())),
                        preferred_element_type=f32)                           # (Lq, B*Lk)
    s = s + mask_ref[...]

    v16 = v.astype(bf16)

    # Per-batch softmax (kept in f32) + PV.  B is tiny (3) -> static unrolled loop.
    for b in range(B):
        sb = s[:, b * Lk:(b + 1) * Lk]                                        # (Lq, Lk)
        m = jnp.max(sb, axis=-1, keepdims=True)
        e = jnp.exp(sb - m)
        p = e / jnp.sum(e, axis=-1, keepdims=True)                            # exact divide
        vb = v16[b * Lk:(b + 1) * Lk, :]                                      # (Lk, HV)
        o_ref[b] = jnp.dot(p.astype(bf16), vb, preferred_element_type=f32)    # (Lq, HV)


def model_forward(x1, x2, wq, wk, wv, attn_mask):
    """x1: (Lq, Dq), x2: (B, Lk, Dk), wq: (HK, Dq), wk: (HK, Dk), wv: (HV, Dk),
    attn_mask broadcastable to (B, Lq, Lk)."""
    Lq, Dq = x1.shape
    B, Lk, Dk = x2.shape
    HK = wq.shape[0]
    HV = wv.shape[0]
    assert wq.shape == (HK, Dq) and wk.shape == (HK, Dk) and wv.shape == (HV, Dk)

    # Mask: broadcast to full shape, then flatten batch into the lane axis so the
    # in-kernel add matches the batched (Lq, B*Lk) score layout.
    attn_mask = jnp.broadcast_to(attn_mask, (B, Lq, Lk)).astype(jnp.float32)
    mask2d = jnp.transpose(attn_mask, (1, 0, 2)).reshape(Lq, B * Lk)

    # Wrapper-side layout/precision plumbing (one-time, tiny):
    #   * fold 1/sqrt(Dq) into Wq (power of two here -> exact under bf16 rounding),
    #   * pre-transpose + fuse Wk|Wv into one (Dk, HK+HV) weight,
    #   * flatten x2's batch into the sublane axis,
    #   * bf16 operands for all matmuls (f32 accumulation inside the kernel).
    scale = 1.0 / math.sqrt(Dq)
    wq_t = (wq.T * scale).astype(jnp.bfloat16)                      # (Dq, HK)
    wkv_t = jnp.concatenate([wk.T, wv.T], axis=1).astype(jnp.bfloat16)   # (Dk, HK+HV)
    x1b = x1.astype(jnp.bfloat16)
    x2f = x2.reshape(B * Lk, Dk).astype(jnp.bfloat16)

    return pl.pallas_call(
        attn_kernel,
        out_shape=jax.ShapeDtypeStruct((B, Lq, HV), jnp.float32),
        grid_spec=pltpu.PrefetchScalarGridSpec(
            num_scalar_prefetch=0,
            grid=(1,),                                   # single step: no per-step pipeline overhead
            in_specs=[
                pl.BlockSpec((Lq, Dq), lambda i: (0, 0)),            # x1 (bf16)
                pl.BlockSpec((B * Lk, Dk), lambda i: (0, 0)),        # x2 flattened (bf16)
                pl.BlockSpec((Dq, HK), lambda i: (0, 0)),            # Wq.T * scale (bf16)
                pl.BlockSpec((Dk, HK + HV), lambda i: (0, 0)),       # [Wk.T | Wv.T] (bf16)
                pl.BlockSpec((Lq, B * Lk), lambda i: (0, 0)),        # mask, 2-D (f32)
            ],
            out_specs=pl.BlockSpec((B, Lq, HV), lambda i: (0, 0, 0)),
        ),
        compiler_params=pltpu.CompilerParams(
            dimension_semantics=("arbitrary",)),
    )(x1b, x2f, wq_t, wkv_t, mask2d)


def reference_forward(x1, x2, wq, wk, wv, attn_mask, operand_dtype):
    """Pure-JAX reference following the torch op order.  `operand_dtype` sets the
    matmul operand precision (accumulation always f32), so it can reproduce the
    kernel's bf16-operand / f32-accumulate policy exactly."""
    d = operand_dtype
    f32 = jnp.float32
    q = lax.dot_general(x1.astype(d), wq.T.astype(d),
                        (((1,), (0,)), ((), ())), preferred_element_type=f32)      # (Lq, HK)
    k = lax.dot_general(x2.astype(d), wk.T.astype(d),
                        (((2,), (0,)), ((), ())), preferred_element_type=f32)      # (B, Lk, HK)
    v = lax.dot_general(x2.astype(d), wv.T.astype(d),
                        (((2,), (0,)), ((), ())), preferred_element_type=f32)      # (B, Lk, HV)
    s = lax.dot_general(q.astype(d), k.astype(d),
                        (((1,), (2,)), ((), ())), preferred_element_type=f32)      # (Lq, B, Lk)
    s = jnp.transpose(s, (1, 0, 2)) / math.sqrt(x1.shape[-1]) + attn_mask          # (B, Lq, Lk)
    p = jax.nn.softmax(s, axis=-1)
    return lax.dot_general(p.astype(d), v.astype(d),
                           (((2,), (1,)), ((0,), (0,))), preferred_element_type=f32)


if __name__ == "__main__":
    # Shapes consistent with the module's forward: Dq == queryDim, Dk == keyDim ==
    # valueDim, B == 3 (the mask's hard-coded leading dim), Lq == keyDim and
    # Lk == queryDim so the (3, keyDim, queryDim) mask broadcasts with qk.
    # nHeads*valueDim == 128 -> lane-dense output stores.
    nHeads, queryDim, keyDim, valueDim = 8, 16, 16, 16
    B, Lq, Lk = 3, keyDim, queryDim

    key = jax.random.PRNGKey(0)
    k1, k2, k3, k4, k5, k6 = jax.random.split(key, 6)

    def linear_w(k, out_f, in_f):   # nn.Linear default init U(-1/sqrt(fan_in), +1/sqrt(fan_in))
        lim = 1.0 / math.sqrt(in_f)
        return jax.random.uniform(k, (out_f, in_f), jnp.float32, -lim, lim)

    wq = linear_w(k1, nHeads * keyDim, queryDim)       # (128, 16)
    wk = linear_w(k2, nHeads * keyDim, keyDim)         # (128, 16)
    wv = linear_w(k3, nHeads * valueDim, valueDim)     # (128, 16)
    attn_mask = jax.random.normal(k4, (B, keyDim, queryDim), jnp.float32) * 1e-5

    x1 = jax.random.normal(k5, (Lq, queryDim), jnp.float32)
    x2 = jax.random.normal(k6, (B, Lk, keyDim), jnp.float32)

    out = jax.block_until_ready(model_forward(x1, x2, wq, wk, wv, attn_mask))
    assert out.shape == (B, Lq, nHeads * valueDim)

    # Primary check: matched-precision reference (bf16 matmul operands, f32 acc,
    # f32 softmax) -- typical max diff ~1e-5; tolerance leaves margin for
    # accumulation-order / rounding-boundary differences across TPU generations.
    ref_bf16 = reference_forward(x1, x2, wq, wk, wv, attn_mask, jnp.bfloat16)
    assert jnp.allclose(out, ref_bf16, atol=5e-3, rtol=5e-3), \
        "mismatch vs matched-precision reference"

    # Loose sanity check vs the full-f32 reference: bounds the bf16-operand error.
    ref_f32 = reference_forward(x1, x2, wq, wk, wv, attn_mask, jnp.float32)
    assert jnp.allclose(out, ref_f32, atol=5e-2, rtol=5e-2), \
        "mismatch vs f32 reference"

    print("KERNEL_OK")
</pallas_src>

<mosaic_0001>
module attributes {stable_mosaic.version = 11 : i64} {
  func.func @attn_kernel(%arg0: i32, %arg1: memref<16x16xbf16, #tpu.memory_space<vmem>>, %arg2: memref<48x16xbf16, #tpu.memory_space<vmem>>, %arg3: memref<16x128xbf16, #tpu.memory_space<vmem>>, %arg4: memref<16x256xbf16, #tpu.memory_space<vmem>>, %arg5: memref<16x48xf32, #tpu.memory_space<vmem>>, %arg6: memref<3x16x128xf32, #tpu.memory_space<vmem>>) attributes {dimension_semantics = [#tpu.dimension_semantics<arbitrary>], iteration_bounds = array<i64: 1>, scalar_prefetch = 0 : i64, scratch_operands = 0 : i64, tpu.core_type = #tpu.core_type<tc>, window_params = [{pipeline_mode = #tpu.pipeline_mode<synchronous>, transform_indices = @transform_0, window_bounds = array<i64: 16, 16>}, {pipeline_mode = #tpu.pipeline_mode<synchronous>, transform_indices = @transform_1, window_bounds = array<i64: 48, 16>}, {pipeline_mode = #tpu.pipeline_mode<synchronous>, transform_indices = @transform_2, window_bounds = array<i64: 16, 128>}, {pipeline_mode = #tpu.pipeline_mode<synchronous>, transform_indices = @transform_3, window_bounds = array<i64: 16, 256>}, {pipeline_mode = #tpu.pipeline_mode<synchronous>, transform_indices = @transform_4, window_bounds = array<i64: 16, 48>}, {pipeline_mode = #tpu.pipeline_mode<synchronous>, transform_indices = @transform_5, window_bounds = array<i64: 3, 16, 128>}]} {
    %c0 = arith.constant 0 : index
    %c0_0 = arith.constant 0 : index
    %0 = vector.load %arg1[%c0, %c0_0] : memref<16x16xbf16, #tpu.memory_space<vmem>>, vector<16x16xbf16>
    %c0_1 = arith.constant 0 : index
    %c0_2 = arith.constant 0 : index
    %1 = vector.load %arg3[%c0_1, %c0_2] : memref<16x128xbf16, #tpu.memory_space<vmem>>, vector<16x128xbf16>
    %cst = arith.constant dense<0.000000e+00> : vector<16x128xf32>
    %2 = tpu.matmul %0, %1, %cst {dimension_numbers = #tpu.dot_dimension_numbers<[1], [0], [0], [1], [0, 0, 1, 1], [], []>} : vector<16x16xbf16>, vector<16x128xbf16>, vector<16x128xf32> -> vector<16x128xf32>
    %c0_3 = arith.constant 0 : index
    %c0_4 = arith.constant 0 : index
    %3 = vector.load %arg2[%c0_3, %c0_4] : memref<48x16xbf16, #tpu.memory_space<vmem>>, vector<48x16xbf16>
    %c0_5 = arith.constant 0 : index
    %c0_6 = arith.constant 0 : index
    %4 = vector.load %arg4[%c0_5, %c0_6] : memref<16x256xbf16, #tpu.memory_space<vmem>>, vector<16x256xbf16>
    %cst_7 = arith.constant dense<0.000000e+00> : vector<48x256xf32>
    %5 = tpu.matmul %3, %4, %cst_7 {dimension_numbers = #tpu.dot_dimension_numbers<[1], [0], [0], [1], [0, 0, 1, 1], [], []>} : vector<48x16xbf16>, vector<16x256xbf16>, vector<48x256xf32> -> vector<48x256xf32>
    %6 = vector.extract_strided_slice %5 {offsets = [0, 0], sizes = [48, 128], strides = [1, 1]} : vector<48x256xf32> to vector<48x128xf32>
    %7 = vector.extract_strided_slice %5 {offsets = [0, 128], sizes = [48, 128], strides = [1, 1]} : vector<48x256xf32> to vector<48x128xf32>
    %8 = arith.truncf %2 : vector<16x128xf32> to vector<16x128xbf16>
    %9 = arith.truncf %6 : vector<48x128xf32> to vector<48x128xbf16>
    %cst_8 = arith.constant dense<0.000000e+00> : vector<16x48xf32>
    %10 = tpu.matmul %8, %9, %cst_8 {dimension_numbers = #tpu.dot_dimension_numbers<[1], [1], [0], [0], [0, 0, 1, 0], [], []>} : vector<16x128xbf16>, vector<48x128xbf16>, vector<16x48xf32> -> vector<16x48xf32>
    %c0_9 = arith.constant 0 : index
    %c0_10 = arith.constant 0 : index
    %11 = vector.load %arg5[%c0_9, %c0_10] : memref<16x48xf32, #tpu.memory_space<vmem>>, vector<16x48xf32>
    %12 = arith.addf %10, %11 : vector<16x48xf32>
    %13 = arith.truncf %7 : vector<48x128xf32> to vector<48x128xbf16>
    %14 = vector.extract_strided_slice %12 {offsets = [0, 0], sizes = [16, 16], strides = [1, 1]} : vector<16x48xf32> to vector<16x16xf32>
    %cst_11 = arith.constant dense<0xFF800000> : vector<16xf32>
    %15 = vector.multi_reduction <maximumf>, %14, %cst_11 [1] : vector<16x16xf32> to vector<16xf32>
    %16 = vector.shape_cast %15 : vector<16xf32> to vector<16x1xf32>
    %17 = vector.broadcast %16 : vector<16x1xf32> to vector<16x16xf32>
    %18 = arith.subf %14, %17 : vector<16x16xf32>
    %19 = math.exp %18 : vector<16x16xf32>
    %cst_12 = arith.constant dense<0.000000e+00> : vector<16xf32>
    %20 = vector.multi_reduction <add>, %19, %cst_12 [1] : vector<16x16xf32> to vector<16xf32>
    %21 = vector.shape_cast %20 : vector<16xf32> to vector<16x1xf32>
    %22 = vector.broadcast %21 : vector<16x1xf32> to vector<16x16xf32>
    %23 = arith.divf %19, %22 : vector<16x16xf32>
    %24 = vector.extract_strided_slice %13 {offsets = [0, 0], sizes = [16, 128], strides = [1, 1]} : vector<48x128xbf16> to vector<16x128xbf16>
    %25 = arith.truncf %23 : vector<16x16xf32> to vector<16x16xbf16>
    %cst_13 = arith.constant dense<0.000000e+00> : vector<16x128xf32>
    %26 = tpu.matmul %25, %24, %cst_13 {dimension_numbers = #tpu.dot_dimension_numbers<[1], [0], [0], [1], [0, 0, 1, 1], [], []>} : vector<16x16xbf16>, vector<16x128xbf16>, vector<16x128xf32> -> vector<16x128xf32>
    %c0_14 = arith.constant 0 : index
    %c0_15 = arith.constant 0 : index
    %c0_16 = arith.constant 0 : index
    %27 = vector.load %arg6[%c0_14, %c0_15, %c0_16] : memref<3x16x128xf32, #tpu.memory_space<vmem>>, vector<1x16x128xf32>
    %28 = vector.shape_cast %27 : vector<1x16x128xf32> to vector<16x128xf32>
    %29 = vector.shape_cast %26 : vector<16x128xf32> to vector<1x16x128xf32>
    tpu.vector_store %arg6[%c0_14, %c0_15, %c0_16], %29 {strides = array<i32>} : memref<3x16x128xf32, #tpu.memory_space<vmem>>, vector<1x16x128xf32>,
    %30 = vector.extract_strided_slice %12 {offsets = [0, 16], sizes = [16, 16], strides = [1, 1]} : vector<16x48xf32> to vector<16x16xf32>
    %cst_17 = arith.constant dense<0xFF800000> : vector<16xf32>
    %31 = vector.multi_reduction <maximumf>, %30, %cst_17 [1] : vector<16x16xf32> to vector<16xf32>
    %32 = vector.shape_cast %31 : vector<16xf32> to vector<16x1xf32>
    %33 = vector.broadcast %32 : vector<16x1xf32> to vector<16x16xf32>
    %34 = arith.subf %30, %33 : vector<16x16xf32>
    %35 = math.exp %34 : vector<16x16xf32>
    %cst_18 = arith.constant dense<0.000000e+00> : vector<16xf32>
    %36 = vector.multi_reduction <add>, %35, %cst_18 [1] : vector<16x16xf32> to vector<16xf32>
    %37 = vector.shape_cast %36 : vector<16xf32> to vector<16x1xf32>
    %38 = vector.broadcast %37 : vector<16x1xf32> to vector<16x16xf32>
    %39 = arith.divf %35, %38 : vector<16x16xf32>
    %40 = vector.extract_strided_slice %13 {offsets = [16, 0], sizes = [16, 128], strides = [1, 1]} : vector<48x128xbf16> to vector<16x128xbf16>
    %41 = arith.truncf %39 : vector<16x16xf32> to vector<16x16xbf16>
    %cst_19 = arith.constant dense<0.000000e+00> : vector<16x128xf32>
    %42 = tpu.matmul %41, %40, %cst_19 {dimension_numbers = #tpu.dot_dimension_numbers<[1], [0], [0], [1], [0, 0, 1, 1], [], []>} : vector<16x16xbf16>, vector<16x128xbf16>, vector<16x128xf32> -> vector<16x128xf32>
    %c1 = arith.constant 1 : index
    %c0_20 = arith.constant 0 : index
    %c0_21 = arith.constant 0 : index
    %43 = vector.load %arg6[%c1, %c0_20, %c0_21] : memref<3x16x128xf32, #tpu.memory_space<vmem>>, vector<1x16x128xf32>
    %44 = vector.shape_cast %43 : vector<1x16x128xf32> to vector<16x128xf32>
    %45 = vector.shape_cast %42 : vector<16x128xf32> to vector<1x16x128xf32>
    tpu.vector_store %arg6[%c1, %c0_20, %c0_21], %45 {strides = array<i32>} : memref<3x16x128xf32, #tpu.memory_space<vmem>>, vector<1x16x128xf32>,
    %46 = vector.extract_strided_slice %12 {offsets = [0, 32], sizes = [16, 16], strides = [1, 1]} : vector<16x48xf32> to vector<16x16xf32>
    %cst_22 = arith.constant dense<0xFF800000> : vector<16xf32>
    %47 = vector.multi_reduction <maximumf>, %46, %cst_22 [1] : vector<16x16xf32> to vector<16xf32>
    %48 = vector.shape_cast %47 : vector<16xf32> to vector<16x1xf32>
    %49 = vector.broadcast %48 : vector<16x1xf32> to vector<16x16xf32>
    %50 = arith.subf %46, %49 : vector<16x16xf32>
    %51 = math.exp %50 : vector<16x16xf32>
    %cst_23 = arith.constant dense<0.000000e+00> : vector<16xf32>
    %52 = vector.multi_reduction <add>, %51, %cst_23 [1] : vector<16x16xf32> to vector<16xf32>
    %53 = vector.shape_cast %52 : vector<16xf32> to vector<16x1xf32>
    %54 = vector.broadcast %53 : vector<16x1xf32> to vector<16x16xf32>
    %55 = arith.divf %51, %54 : vector<16x16xf32>
    %56 = vector.extract_strided_slice %13 {offsets = [32, 0], sizes = [16, 128], strides = [1, 1]} : vector<48x128xbf16> to vector<16x128xbf16>
    %57 = arith.truncf %55 : vector<16x16xf32> to vector<16x16xbf16>
    %cst_24 = arith.constant dense<0.000000e+00> : vector<16x128xf32>
    %58 = tpu.matmul %57, %56, %cst_24 {dimension_numbers = #tpu.dot_dimension_numbers<[1], [0], [0], [1], [0, 0, 1, 1], [], []>} : vector<16x16xbf16>, vector<16x128xbf16>, vector<16x128xf32> -> vector<16x128xf32>
    %c2 = arith.constant 2 : index
    %c0_25 = arith.constant 0 : index
    %c0_26 = arith.constant 0 : index
    %59 = vector.load %arg6[%c2, %c0_25, %c0_26] : memref<3x16x128xf32, #tpu.memory_space<vmem>>, vector<1x16x128xf32>
    %60 = vector.shape_cast %59 : vector<1x16x128xf32> to vector<16x128xf32>
    %61 = vector.shape_cast %58 : vector<16x128xf32> to vector<1x16x128xf32>
    tpu.vector_store %arg6[%c2, %c0_25, %c0_26], %61 {strides = array<i32>} : memref<3x16x128xf32, #tpu.memory_space<vmem>>, vector<1x16x128xf32>,
    return
  }
  func.func @transform_0(%arg0: i32) -> (i32, i32) {
    %c0_i32 = arith.constant 0 : i32
    %c0_i32_0 = arith.constant 0 : i32
    %c0_i32_1 = arith.constant 0 : i32
    return %c0_i32, %c0_i32_0 : i32, i32
  }
  func.func @transform_1(%arg0: i32) -> (i32, i32) {
    %c0_i32 = arith.constant 0 : i32
    %c0_i32_0 = arith.constant 0 : i32
    %c0_i32_1 = arith.constant 0 : i32
    return %c0_i32, %c0_i32_0 : i32, i32
  }
  func.func @transform_2(%arg0: i32) -> (i32, i32) {
    %c0_i32 = arith.constant 0 : i32
    %c0_i32_0 = arith.constant 0 : i32
    %c0_i32_1 = arith.constant 0 : i32
    return %c0_i32, %c0_i32_0 : i32, i32
  }
  func.func @transform_3(%arg0: i32) -> (i32, i32) {
    %c0_i32 = arith.constant 0 : i32
    %c0_i32_0 = arith.constant 0 : i32
    %c0_i32_1 = arith.constant 0 : i32
    return %c0_i32, %c0_i32_0 : i32, i32
  }
  func.func @transform_4(%arg0: i32) -> (i32, i32) {
    %c0_i32 = arith.constant 0 : i32
    %c0_i32_0 = arith.constant 0 : i32
    %c0_i32_1 = arith.constant 0 : i32
    return %c0_i32, %c0_i32_0 : i32, i32
  }
  func.func @transform_5(%arg0: i32) -> (i32, i32, i32) {
    %c0_i32 = arith.constant 0 : i32
    %c0_i32_0 = arith.constant 0 : i32
    %c0_i32_1 = arith.constant 0 : i32
    %c0_i32_2 = arith.constant 0 : i32
    return %c0_i32, %c0_i32_0, %c0_i32_1 : i32, i32, i32
  }
}

</mosaic_0001>

<llo_original>
// kernel: tpu_custom_call.1
$region0: #{tpu_custom_call.1}
  #allocation0 [shape = 'u32[]', space=smem, size = 0x4, offset = 0x4, fixed_abs, tag = 'smem constant byte address 0x4 - core index']
  #allocation1 [shape = 'u32[144,128]{1,0:T(1,128)}', space=vmem, size = 0x12000, scoped, tag = 'internal scratch']
  %s0 = inlined_call_operand.hbm [shape: bf16[16,16], index: 0, kind: input, shape index: {}]
  %s1 = inlined_call_operand.vmem [shape: bf16[48,16], index: 1, kind: input, shape index: {}]
  %s2 = inlined_call_operand.hbm [shape: bf16[16,128], index: 2, kind: input, shape index: {}]
  %s3 = inlined_call_operand.vmem [shape: bf16[16,256], index: 3, kind: input, shape index: {}]
  %s4 = inlined_call_operand.vmem [shape: f32[16,48], index: 4, kind: input, shape index: {}]
  %s5 = inlined_call_operand.hbm [shape: f32[3,16,128], index: 5, kind: output, shape index: {}]
  %s6 = sld [smem:[#allocation0]]
  $region38: #{tpu_custom_call.1} parent=0
    _
  %s8 = ssub.s32 1, %s6
  %s9 = scalar_select 0, %s8, %s6
  $region1: #{tpu_custom_call.1} parent=0
    #allocation2 [shape = 'u8[4096]{0}', space=vmem, size = 0x1000, scoped, tag = 'input window, operand 0, single buffered']
    #allocation3 [shape = 's32[1]{0}', space=sflag, size = 0x4, scoped, tag = 'scoped memory for tpu_custom_call.1']
    #allocation4 [shape = 's32[1]{0}', space=sflag, size = 0x4, scoped, tag = 'scoped memory for tpu_custom_call.1']
    #allocation5 [shape = 'u8[4096]{0}', space=vmem, size = 0x1000, scoped, tag = 'input window, operand 2, single buffered']
    #allocation6 [shape = 's32[1]{0}', space=sflag, size = 0x4, scoped, tag = 'scoped memory for tpu_custom_call.1']
    #allocation7 [shape = 'u8[24576]{0}', space=vmem, size = 0x6000, scoped, tag = 'output window, operand 0, single buffered']
    %10 = vsyncpa [#allocation3], 0
    %11 = vsyncpa [#allocation6], 0
    %12 = vsyncpa [#allocation4], 0
    // Predicated region
    $region2: #{tpu_custom_call.1} parent=1 // pred_check
      _
    $region3: #{tpu_custom_call.1} parent=1 // pred_check_branch
      %14 = sbr.rel (0) target = $region5
    $region4: #{tpu_custom_call.1} parent=1 // pred_region
      %s16 = ssub.s32 128, 128
      %17 = vsyncadd [#allocation3], %s16
      %s18 = sshll.u32 [#allocation2], 4
      %s19 = int_to_ptr.vmem [resolvable:$true] %s18
      %24 = dma.hbm_to_vmem [thread:$0]  %s0, 128, %s19, [#allocation3], 64, 64, 4
    $region5: #{tpu_custom_call.1} parent=1 // pred_fallthru
      _
    // Predicated region
    $region6: #{tpu_custom_call.1} parent=1 // pred_check
      _
    $region7: #{tpu_custom_call.1} parent=1 // pred_check_branch
      %26 = sbr.rel (0) target = $region9
    $region8: #{tpu_custom_call.1} parent=1 // pred_region
      _
    $region9: #{tpu_custom_call.1} parent=1 // pred_fallthru
      _
    // Predicated region
    $region10: #{tpu_custom_call.1} parent=1 // pred_check
      _
    $region11: #{tpu_custom_call.1} parent=1 // pred_check_branch
      %28 = sbr.rel (0) target = $region13
    $region12: #{tpu_custom_call.1} parent=1 // pred_region
      %s30 = ssub.s32 128, 128
      %31 = vsyncadd [#allocation6], %s30
      %s32 = sshll.u32 [#allocation5], 4
      %s33 = int_to_ptr.vmem [resolvable:$true] %s32
      %38 = dma.hbm_to_vmem [thread:$0]  %s2, 128, %s33, [#allocation6], 64, 64, 4
    $region13: #{tpu_custom_call.1} parent=1 // pred_fallthru
      _
    // Predicated region
    $region14: #{tpu_custom_call.1} parent=1 // pred_check
      _
    $region15: #{tpu_custom_call.1} parent=1 // pred_check_branch
      %40 = sbr.rel (0) target = $region17
    $region16: #{tpu_custom_call.1} parent=1 // pred_region
      _
    $region17: #{tpu_custom_call.1} parent=1 // pred_fallthru
      _
    // Predicated region
    $region18: #{tpu_custom_call.1} parent=1 // pred_check
      _
    $region19: #{tpu_custom_call.1} parent=1 // pred_check_branch
      %42 = sbr.rel (0) target = $region21
    $region20: #{tpu_custom_call.1} parent=1 // pred_region
      _
    $region21: #{tpu_custom_call.1} parent=1 // pred_fallthru
      _
    // Predicated region
    $region22: #{tpu_custom_call.1} parent=1 // pred_check
      _
    $region23: #{tpu_custom_call.1} parent=1 // pred_check_branch
      %44 = sbr.rel (0) target = $region25
    $region24: #{tpu_custom_call.1} parent=1 // pred_region
      %45 = dma.done [#allocation3], 128
    $region25: #{tpu_custom_call.1} parent=1 // pred_fallthru
      _
    // Predicated region
    $region26: #{tpu_custom_call.1} parent=1 // pred_check
      _
    $region27: #{tpu_custom_call.1} parent=1 // pred_check_branch
      %47 = sbr.rel (0) target = $region29
    $region28: #{tpu_custom_call.1} parent=1 // pred_region
      %48 = dma.done [#allocation6], 128
    $region29: #{tpu_custom_call.1} parent=1 // pred_fallthru
      _
    %v50 = vld [vmem:[#allocation2] sm:$0xf]
    %v51 = vld [vmem:[#allocation2 + $0x4] sm:$0xf]
    %v52 = vld [vmem:[#allocation5] sm:$0xf]
    %v53 = vld [vmem:[#allocation5 + $0x4] sm:$0xf]
    %v56 = vunpack.c.l.b16 %v50
    %v57 = vunpack.c.l.b16 %v51
    %v58 = vpack.c.b16 %v57, %v56
    %v61 = vunpack.c.l.b16 %v52
    %v62 = vunpack.c.l.b16 %v53
    %v63 = vpack.c.b16 %v62, %v61
    %vm65 = vcmask 130048
    %v67 = vsel %vm65, %v58, 0
    %69 = vmatprep.subr.bf16.mxu0 0
    %70 = vmatpush1.bf16.msra.mxu0 0
    %71 = vmatprep.subr.bf16.mxu0 0
    %72 = vmatpush1.bf16.msra.mxu0 0
    %73 = vmatprep.subr.bf16.mxu0 0
    %74 = vmatpush1.bf16.msra.mxu0 0
    %75 = vmatprep.subr.bf16.mxu0 0
    %76 = vmatpush1.bf16.msra.mxu0 0
    %77 = vmatprep.subr.bf16.mxu0 0
    %78 = vmatpush1.bf16.msra.mxu0 0
    %79 = vmatprep.subr.bf16.mxu0 0
    %80 = vmatpush1.bf16.msra.mxu0 0
    %81 = vmatprep.subr.bf16.mxu0 0
    %82 = vmatpush1.bf16.msra.mxu0 0
    %83 = vmatprep.subr.bf16.mxu0 0
    %84 = vmatpush1.bf16.msra.mxu0 %v63
    %85 = vmatprep.subr.bf16.mxu0 0
    %86 = vmatpush2.bf16.msra.mxu0 0
    %87 = vmatprep.subr.bf16.mxu0 0
    %88 = vmatpush2.bf16.msra.mxu0 0
    %89 = vmatprep.subr.bf16.mxu0 0
    %90 = vmatpush2.bf16.msra.mxu0 0
    %91 = vmatprep.subr.bf16.mxu0 0
    %92 = vmatpush2.bf16.msra.mxu0 0
    %93 = vmatprep.subr.bf16.mxu0 0
    %94 = vmatpush2.bf16.msra.mxu0 0
    %95 = vmatprep.subr.bf16.mxu0 0
    %96 = vmatpush2.bf16.msra.mxu0 0
    %97 = vmatprep.subr.bf16.mxu0 0
    %98 = vmatpush2.bf16.msra.mxu0 0
    %99 = vmatprep.subr.bf16.mxu0 0
    %100 = vmatpush2.bf16.msra.mxu0 0
    %101 = vmatprep.mubr.bf16.mxu0 0
    %102 = vmatmul.mubr.bf16.gmra.mxu0 %v67
    %v103 = vpop.f32.mrf.mxu0
    %v104 = vadd.f32 0.0, %v103
    %v105 = vpop.f32.mrf.mxu0
    %v106 = vpop.f32.mrf.mxu0
    %v107 = vadd.f32 0.0, %v106
    %v108 = vpop.f32.mrf.mxu0
    %109 = vdwg.mxu0
    %v110 = vld [vmem:[%s1] sm:$0xf]
    %v111 = vld [vmem:[%s1 + $0x4] sm:$0xf]
    %v112 = vld [vmem:[%s1 + $0x8] sm:$0xf]
    %v113 = vld [vmem:[%s1 + $0xc] sm:$0xf]
    %v114 = vld [vmem:[%s1 + $0x10] sm:$0xf]
    %v115 = vld [vmem:[%s1 + $0x14] sm:$0xf]
    %v116 = vld [vmem:[%s3] sm:$0xff]
    %v117 = vld [vmem:[%s3 + $0x8] sm:$0xff]
    %v124 = vunpack.c.l.b16 %v110
    %v125 = vunpack.c.l.b16 %v111
    %v126 = vunpack.c.l.b16 %v112
    %v127 = vunpack.c.l.b16 %v113
    %v128 = vunpack.c.l.b16 %v114
    %v129 = vunpack.c.l.b16 %v115
    %v130 = vpack.c.b16 %v125, %v124
    %v131 = vpack.c.b16 %v127, %v126
    %v132 = vpack.c.b16 %v129, %v128
    %v135 = vunpack.c.l.b16 %v116
    %v136 = vunpack.c.h.b16 %v116
    %v137 = vunpack.c.l.b16 %v117
    %v138 = vunpack.c.h.b16 %v117
    %v139 = vpack.c.b16 %v137, %v135
    %v140 = vpack.c.b16 %v138, %v136
    %v144 = vsel %vm65, %v130, 0
    %v147 = vsel %vm65, %v131, 0
    %v150 = vsel %vm65, %v132, 0
    %152 = vmatprep.subr.bf16.mxu0 0
    %153 = vmatpush1.bf16.msra.mxu0 0
    %154 = vmatprep.subr.bf16.mxu0 0
    %155 = vmatpush1.bf16.msra.mxu0 0
    %156 = vmatprep.subr.bf16.mxu0 0
    %157 = vmatpush1.bf16.msra.mxu0 0
    %158 = vmatprep.subr.bf16.mxu0 0
    %159 = vmatpush1.bf16.msra.mxu0 0
    %160 = vmatprep.subr.bf16.mxu0 0
    %161 = vmatpush1.bf16.msra.mxu0 0
    %162 = vmatprep.subr.bf16.mxu0 0
    %163 = vmatpush1.bf16.msra.mxu0 0
    %164 = vmatprep.subr.bf16.mxu0 0
    %165 = vmatpush1.bf16.msra.mxu0 0
    %166 = vmatprep.subr.bf16.mxu0 %v140
    %167 = vmatpush1.bf16.msra.mxu0 %v139
    %168 = vmatprep.subr.bf16.mxu0 0
    %169 = vmatpush2.bf16.msra.mxu0 0
    %170 = vmatprep.subr.bf16.mxu0 0
    %171 = vmatpush2.bf16.msra.mxu0 0
    %172 = vmatprep.subr.bf16.mxu0 0
    %173 = vmatpush2.bf16.msra.mxu0 0
    %174 = vmatprep.subr.bf16.mxu0 0
    %175 = vmatpush2.bf16.msra.mxu0 0
    %176 = vmatprep.subr.bf16.mxu0 0
    %177 = vmatpush2.bf16.msra.mxu0 0
    %178 = vmatprep.subr.bf16.mxu0 0
    %179 = vmatpush2.bf16.msra.mxu0 0
    %180 = vmatprep.subr.bf16.mxu0 0
    %181 = vmatpush2.bf16.msra.mxu0 0
    %182 = vmatprep.subr.bf16.mxu0 0
    %183 = vmatpush2.bf16.msra.mxu0 0
    %184 = vmatprep.mubr.bf16.mxu0 0
    %185 = vmatmul.mubr.bf16.gmra.mxu0 %v144
    %v186 = vpop.f32.mrf.mxu0
    %v187 = vadd.f32 0.0, %v186
    %v188 = vpop.f32.mrf.mxu0
    %v189 = vadd.f32 0.0, %v188
    %v190 = vpop.f32.mrf.mxu0
    %v191 = vadd.f32 0.0, %v190
    %v192 = vpop.f32.mrf.mxu0
    %v193 = vadd.f32 0.0, %v192
    %194 = vmatprep.mubr.bf16.mxu0 0
    %195 = vmatmul.mubr.bf16.gmra.mxu0 %v147
    %v196 = vpop.f32.mrf.mxu0
    %v197 = vadd.f32 0.0, %v196
    %v198 = vpop.f32.mrf.mxu0
    %v199 = vadd.f32 0.0, %v198
    %v200 = vpop.f32.mrf.mxu0
    %v201 = vadd.f32 0.0, %v200
    %v202 = vpop.f32.mrf.mxu0
    %v203 = vadd.f32 0.0, %v202
    %204 = vmatprep.mubr.bf16.mxu0 0
    %205 = vmatmul.mubr.bf16.gmra.mxu0 %v150
    %v206 = vpop.f32.mrf.mxu0
    %v207 = vadd.f32 0.0, %v206
    %v208 = vpop.f32.mrf.mxu0
    %v209 = vadd.f32 0.0, %v208
    %v210 = vpop.f32.mrf.mxu0
    %v211 = vadd.f32 0.0, %v210
    %v212 = vpop.f32.mrf.mxu0
    %v213 = vadd.f32 0.0, %v212
    %214 = vdwg.mxu0
    %v215 = vpack.c.bf16 %v107, %v104
    %v216 = vpack.c.bf16 %v191, %v187
    %v217 = vpack.c.bf16 %v201, %v197
    %v218 = vpack.c.bf16 %v211, %v207
    %v219 = vld [vmem:[%s4] sm:$0xff]
    %v220 = vld [vmem:[%s4 + $0x8] sm:$0xff]
    %221 = vmatprep.subr.bf16.mxu0 0
    %222 = vmatpush1.bf16.xpose.msra.mxu0 0
    %223 = vmatprep.subr.bf16.mxu0 0
    %224 = vmatpush1.bf16.xpose.msra.mxu0 0
    %225 = vmatprep.subr.bf16.mxu0 0
    %226 = vmatpush1.bf16.xpose.msra.mxu0 0
    %227 = vmatprep.subr.bf16.mxu0 0
    %228 = vmatpush1.bf16.xpose.msra.mxu0 0
    %229 = vmatprep.subr.bf16.mxu0 0
    %230 = vmatpush1.bf16.xpose.msra.mxu0 0
    %231 = vmatprep.subr.bf16.mxu0 0
    %232 = vmatpush1.bf16.xpose.msra.mxu0 %v218
    %233 = vmatprep.subr.bf16.mxu0 0
    %234 = vmatpush1.bf16.xpose.msra.mxu0 %v217
    %235 = vmatprep.subr.bf16.mxu0 0
    %236 = vmatpush1.bf16.xpose.msra.mxu0 %v216
    %237 = vmatprep.subr.bf16.mxu0 0
    %238 = vmatpush2.bf16.xpose.msra.mxu0 0
    %239 = vmatprep.subr.bf16.mxu0 0
    %240 = vmatpush2.bf16.xpose.msra.mxu0 0
    %241 = vmatprep.subr.bf16.mxu0 0
    %242 = vmatpush2.bf16.xpose.msra.mxu0 0
    %243 = vmatprep.subr.bf16.mxu0 0
    %244 = vmatpush2.bf16.xpose.msra.mxu0 0
    %245 = vmatprep.subr.bf16.mxu0 0
    %246 = vmatpush2.bf16.xpose.msra.mxu0 0
    %247 = vmatprep.subr.bf16.mxu0 0
    %248 = vmatpush2.bf16.xpose.msra.mxu0 0
    %249 = vmatprep.subr.bf16.mxu0 0
    %250 = vmatpush2.bf16.xpose.msra.mxu0 0
    %251 = vmatprep.subr.bf16.mxu0 0
    %252 = vmatpush2.bf16.xpose.msra.mxu0 0
    %253 = vmatprep.mubr.bf16.mxu0 0
    %254 = vmatmul.mubr.bf16.gmra.mxu0 %v215
    %v255 = vpop.f32.mrf.mxu0
    %v256 = vadd.f32 %v219, %v255
    %v257 = vpop.f32.mrf.mxu0
    %v258 = vpop.f32.mrf.mxu0
    %v259 = vadd.f32 %v220, %v258
    %v260 = vpop.f32.mrf.mxu0
    %261 = vdwg.mxu0
    %v262 = vpack.c.bf16 %v193, %v189
    %v263 = vpack.c.bf16 %v203, %v199
    %v264 = vpack.c.bf16 %v213, %v209
    %v265 = vsel %vm65, %v256, -inf
    %266 = vmax.xlane.f32.xlu0 %v265
    %v267 = vpop.xlane.xlu0 %266
    %v268 = vsel %vm65, %v259, -inf
    %269 = vmax.xlane.f32.xlu0 %v268
    %v270 = vpop.xlane.xlu0 %269
    %v271 = vsub.f32 %v256, %v267
    %v272 = vsub.f32 %v259, %v270
    %v273 = vmul.f32 %v271, 1.442695
    %v274 = vpow.pop %v273
    %v275 = vmul.f32 %v272, 1.442695
    %v276 = vpow.pop %v275
    %v277 = vsel %vm65, %v274, 0.0
    %278 = vadd.xlane.f32.xlu0 %v277
    %v279 = vpop.xlane.xlu0 %278
    %v280 = vsel %vm65, %v276, 0.0
    %281 = vadd.xlane.f32.xlu0 %v280
    %v282 = vpop.xlane.xlu0 %281
    %v283 = vrcp.pop %v279
    %v284 = vmul.f32 %v274, %v283
    %v285 = vrcp.pop %v282
    %v286 = vmul.f32 %v276, %v285
    %v287 = vpack.c.bf16 %v286, %v284
    %v289 = vsel %vm65, %v287, 0
    %291 = vmatprep.subr.bf16.mxu0 0
    %292 = vmatpush1.bf16.msra.mxu0 0
    %293 = vmatprep.subr.bf16.mxu0 0
    %294 = vmatpush1.bf16.msra.mxu0 0
    %295 = vmatprep.subr.bf16.mxu0 0
    %296 = vmatpush1.bf16.msra.mxu0 0
    %297 = vmatprep.subr.bf16.mxu0 0
    %298 = vmatpush1.bf16.msra.mxu0 0
    %299 = vmatprep.subr.bf16.mxu0 0
    %300 = vmatpush1.bf16.msra.mxu0 0
    %301 = vmatprep.subr.bf16.mxu0 0
    %302 = vmatpush1.bf16.msra.mxu0 0
    %303 = vmatprep.subr.bf16.mxu0 0
    %304 = vmatpush1.bf16.msra.mxu0 0
    %305 = vmatprep.subr.bf16.mxu0 0
    %306 = vmatpush1.bf16.msra.mxu0 %v262
    %307 = vmatprep.subr.bf16.mxu0 0
    %308 = vmatpush2.bf16.msra.mxu0 0
    %309 = vmatprep.subr.bf16.mxu0 0
    %310 = vmatpush2.bf16.msra.mxu0 0
    %311 = vmatprep.subr.bf16.mxu0 0
    %312 = vmatpush2.bf16.msra.mxu0 0
    %313 = vmatprep.subr.bf16.mxu0 0
    %314 = vmatpush2.bf16.msra.mxu0 0
    %315 = vmatprep.subr.bf16.mxu0 0
    %316 = vmatpush2.bf16.msra.mxu0 0
    %317 = vmatprep.subr.bf16.mxu0 0
    %318 = vmatpush2.bf16.msra.mxu0 0
    %319 = vmatprep.subr.bf16.mxu0 0
    %320 = vmatpush2.bf16.msra.mxu0 0
    %321 = vmatprep.subr.bf16.mxu0 0
    %322 = vmatpush2.bf16.msra.mxu0 0
    %323 = vmatprep.mubr.bf16.mxu0 0
    %324 = vmatmul.mubr.bf16.gmra.mxu0 %v289
    %v325 = vpop.f32.mrf.mxu0
    %v326 = vadd.f32 0.0, %v325
    %v327 = vpop.f32.mrf.mxu0
    %v328 = vpop.f32.mrf.mxu0
    %v329 = vadd.f32 0.0, %v328
    %v330 = vpop.f32.mrf.mxu0
    %331 = vdwg.mxu0
    %332 = vst [vmem:[#allocation7] sm:$0xff] %v326
    %333 = vst [vmem:[#allocation7 + $0x8] sm:$0xff] %v329
    %vm334 = vcmask 261248
    %v335 = vsel %vm334, %v256, -inf
    %336 = vmax.xlane.f32.xlu0 %v335
    %v337 = vpop.xlane.xlu0 %336
    %v338 = vsel %vm334, %v259, -inf
    %339 = vmax.xlane.f32.xlu0 %v338
    %v340 = vpop.xlane.xlu0 %339
    %v341 = vsub.f32 %v256, %v337
    %v342 = vsub.f32 %v259, %v340
    %v343 = vmul.f32 %v341, 1.442695
    %v344 = vpow.pop %v343
    %v345 = vmul.f32 %v342, 1.442695
    %v346 = vpow.pop %v345
    %349 = vrot.lane.b32.xlu0 %v344, 112
    %v350 = vpop.permute.xlu0 %349
    %351 = vrot.lane.b32.xlu0 %v346, 112
    %v352 = vpop.permute.xlu0 %351
    %v355 = vsel %vm65, %v350, 0.0
    %356 = vadd.xlane.f32.xlu0 %v355
    %v357 = vpop.xlane.xlu0 %356
    %v358 = vsel %vm65, %v352, 0.0
    %359 = vadd.xlane.f32.xlu0 %v358
    %v360 = vpop.xlane.xlu0 %359
    %v361 = vrcp.pop %v357
    %v362 = vmul.f32 %v344, %v361
    %v363 = vrcp.pop %v360
    %v364 = vmul.f32 %v346, %v363
    %v365 = vpack.c.bf16 %v364, %v362
    %367 = vrot.lane.b32.xlu0 %v365, 112
    %v368 = vpop.permute.xlu0 %367
    %v370 = vsel %vm65, %v368, 0
    %372 = vmatprep.subr.bf16.mxu0 0
    %373 = vmatpush1.bf16.msra.mxu0 0
    %374 = vmatprep.subr.bf16.mxu0 0
    %375 = vmatpush1.bf16.msra.mxu0 0
    %376 = vmatprep.subr.bf16.mxu0 0
    %377 = vmatpush1.bf16.msra.mxu0 0
    %378 = vmatprep.subr.bf16.mxu0 0
    %379 = vmatpush1.bf16.msra.mxu0 0
    %380 = vmatprep.subr.bf16.mxu0 0
    %381 = vmatpush1.bf16.msra.mxu0 0
    %382 = vmatprep.subr.bf16.mxu0 0
    %383 = vmatpush1.bf16.msra.mxu0 0
    %384 = vmatprep.subr.bf16.mxu0 0
    %385 = vmatpush1.bf16.msra.mxu0 0
    %386 = vmatprep.subr.bf16.mxu0 0
    %387 = vmatpush1.bf16.msra.mxu0 %v263
    %388 = vmatprep.subr.bf16.mxu0 0
    %389 = vmatpush2.bf16.msra.mxu0 0
    %390 = vmatprep.subr.bf16.mxu0 0
    %391 = vmatpush2.bf16.msra.mxu0 0
    %392 = vmatprep.subr.bf16.mxu0 0
    %393 = vmatpush2.bf16.msra.mxu0 0
    %394 = vmatprep.subr.bf16.mxu0 0
    %395 = vmatpush2.bf16.msra.mxu0 0
    %396 = vmatprep.subr.bf16.mxu0 0
    %397 = vmatpush2.bf16.msra.mxu0 0
    %398 = vmatprep.subr.bf16.mxu0 0
    %399 = vmatpush2.bf16.msra.mxu0 0
    %400 = vmatprep.subr.bf16.mxu0 0
    %401 = vmatpush2.bf16.msra.mxu0 0
    %402 = vmatprep.subr.bf16.mxu0 0
    %403 = vmatpush2.bf16.msra.mxu0 0
    %404 = vmatprep.mubr.bf16.mxu0 0
    %405 = vmatmul.mubr.bf16.gmra.mxu0 %v370
    %v406 = vpop.f32.mrf.mxu0
    %v407 = vadd.f32 0.0, %v406
    %v408 = vpop.f32.mrf.mxu0
    %v409 = vpop.f32.mrf.mxu0
    %v410 = vadd.f32 0.0, %v409
    %v411 = vpop.f32.mrf.mxu0
    %412 = vdwg.mxu0
    %s413 = scalar_lea.vmem [#allocation7], 16
    %414 = vst [vmem:[%s413] sm:$0xff] %v407
    %415 = vst [vmem:[%s413 + $0x8] sm:$0xff] %v410
    %vm416 = vcmask 392448
    %v417 = vsel %vm416, %v256, -inf
    %418 = vmax.xlane.f32.xlu0 %v417
    %v419 = vpop.xlane.xlu0 %418
    %v420 = vsel %vm416, %v259, -inf
    %421 = vmax.xlane.f32.xlu0 %v420
    %v422 = vpop.xlane.xlu0 %421
    %v423 = vsub.f32 %v256, %v419
    %v424 = vsub.f32 %v259, %v422
    %v425 = vmul.f32 %v423, 1.442695
    %v426 = vpow.pop %v425
    %v427 = vmul.f32 %v424, 1.442695
    %v428 = vpow.pop %v427
    %431 = vrot.lane.b32.xlu0 %v426, 96
    %v432 = vpop.permute.xlu0 %431
    %433 = vrot.lane.b32.xlu0 %v428, 96
    %v434 = vpop.permute.xlu0 %433
    %v437 = vsel %vm65, %v432, 0.0
    %438 = vadd.xlane.f32.xlu0 %v437
    %v439 = vpop.xlane.xlu0 %438
    %v440 = vsel %vm65, %v434, 0.0
    %441 = vadd.xlane.f32.xlu0 %v440
    %v442 = vpop.xlane.xlu0 %441
    %v443 = vrcp.pop %v439
    %v444 = vmul.f32 %v426, %v443
    %v445 = vrcp.pop %v442
    %v446 = vmul.f32 %v428, %v445
    %v447 = vpack.c.bf16 %v446, %v444
    %449 = vrot.lane.b32.xlu0 %v447, 96
    %v450 = vpop.permute.xlu0 %449
    %v452 = vsel %vm65, %v450, 0
    %454 = vmatprep.subr.bf16.mxu0 0
    %455 = vmatpush1.bf16.msra.mxu0 0
    %456 = vmatprep.subr.bf16.mxu0 0
    %457 = vmatpush1.bf16.msra.mxu0 0
    %458 = vmatprep.subr.bf16.mxu0 0
    %459 = vmatpush1.bf16.msra.mxu0 0
    %460 = vmatprep.subr.bf16.mxu0 0
    %461 = vmatpush1.bf16.msra.mxu0 0
    %462 = vmatprep.subr.bf16.mxu0 0
    %463 = vmatpush1.bf16.msra.mxu0 0
    %464 = vmatprep.subr.bf16.mxu0 0
    %465 = vmatpush1.bf16.msra.mxu0 0
    %466 = vmatprep.subr.bf16.mxu0 0
    %467 = vmatpush1.bf16.msra.mxu0 0
    %468 = vmatprep.subr.bf16.mxu0 0
    %469 = vmatpush1.bf16.msra.mxu0 %v264
    %470 = vmatprep.subr.bf16.mxu0 0
    %471 = vmatpush2.bf16.msra.mxu0 0
    %472 = vmatprep.subr.bf16.mxu0 0
    %473 = vmatpush2.bf16.msra.mxu0 0
    %474 = vmatprep.subr.bf16.mxu0 0
    %475 = vmatpush2.bf16.msra.mxu0 0
    %476 = vmatprep.subr.bf16.mxu0 0
    %477 = vmatpush2.bf16.msra.mxu0 0
    %478 = vmatprep.subr.bf16.mxu0 0
    %479 = vmatpush2.bf16.msra.mxu0 0
    %480 = vmatprep.subr.bf16.mxu0 0
    %481 = vmatpush2.bf16.msra.mxu0 0
    %482 = vmatprep.subr.bf16.mxu0 0
    %483 = vmatpush2.bf16.msra.mxu0 0
    %484 = vmatprep.subr.bf16.mxu0 0
    %485 = vmatpush2.bf16.msra.mxu0 0
    %486 = vmatprep.mubr.bf16.mxu0 0
    %487 = vmatmul.mubr.bf16.gmra.mxu0 %v452
    %v488 = vpop.f32.mrf.mxu0
    %v489 = vadd.f32 0.0, %v488
    %v490 = vpop.f32.mrf.mxu0
    %v491 = vpop.f32.mrf.mxu0
    %v492 = vadd.f32 0.0, %v491
    %v493 = vpop.f32.mrf.mxu0
    %494 = vdwg.mxu0
    %s495 = scalar_lea.vmem [#allocation7], 32
    %496 = vst [vmem:[%s495] sm:$0xff] %v489
    %497 = vst [vmem:[%s495 + $0x8] sm:$0xff] %v492
    // Predicated region
    $region30: #{tpu_custom_call.1} parent=1 // pred_check
      _
    $region31: #{tpu_custom_call.1} parent=1 // pred_check_branch
      %499 = sbr.rel (0) target = $region33
    $region32: #{tpu_custom_call.1} parent=1 // pred_region
      %s501 = ssub.s32 768, 768
      %502 = vsyncadd [#allocation4], %s501
      %s503 = sshll.u32 [#allocation7], 4
      %s504 = int_to_ptr.vmem [resolvable:$true] %s503
      %509 = dma.vmem_to_hbm [thread:$0]  %s504, 768, %s5, [#allocation4], 128, 128, 8
    $region33: #{tpu_custom_call.1} parent=1 // pred_fallthru
      _
    // Predicated region
    $region34: #{tpu_custom_call.1} parent=1 // pred_check
      _
    $region35: #{tpu_custom_call.1} parent=1 // pred_check_branch
      %511 = sbr.rel (0) target = $region37
    $region36: #{tpu_custom_call.1} parent=1 // pred_region
      %512 = dma.done [#allocation4], 768
    $region37: #{tpu_custom_call.1} parent=1 // pred_fallthru
      _
    %513 = vsyncpa [#allocation3], 1
    %514 = vsyncpa [#allocation6], 1
    %515 = vsyncpa [#allocation4], 1

</llo_original>
